<compile_context>
chip_gen: v7x
topology: tpu7x:2x2x1
jax: 0.10.0
libtpu: 0.0.40
codegen_flags: <defaults>
</compile_context>

<pallas_src>
import jax
import jax.numpy as jnp
from jax.experimental import pallas as pl
from jax.experimental.pallas import tpu as pltpu


# ----------------------------- Pallas kernel ------------------------------ #
def _kld_kernel(mu_q_ref, sq_ref, mu_p_ref, sp_ref, out_ref):
    """Block of Bb batch rows: inputs (Bb, D_pad) f32 -> out (Bb, 1) f32."""
    mu_q = mu_q_ref[...]
    sq = sq_ref[...]
    mu_p = mu_p_ref[...]
    sp = sp_ref[...]

    dmu = mu_q - mu_p
    inv_var_q = jnp.exp(-sq)                      # EUP
    ratio = jnp.exp(sp - sq)                      # EUP
    # Per-element KL contribution; zero-padded lanes contribute exactly 0.
    term = (sq - sp) - 1.0 + ratio + dmu * dmu * inv_var_q
    out_ref[...] = 0.5 * jnp.sum(term, axis=-1, keepdims=True)


# ------------------------------ wrapper ------------------------------------ #
def _round_up(x, n):
    return ((x + n - 1) // n) * n


def _choose_block_rows(batch, d_pad, budget_bytes=16 * 1024 * 1024):
    """Pick Bb so that 4 double-buffered (Bb, D_pad) f32 inputs fit the budget
    (budget chosen to stay under the default scoped-VMEM limit on all chips,
    including v7x)."""
    bytes_per_row = 4 * d_pad * 4 * 2            # 4 inputs, f32, double-buffered
    bb = max(8, budget_bytes // bytes_per_row)
    bb = min(bb, 1024)
    bb = (bb // 8) * 8                           # sublane alignment
    bb = min(bb, _round_up(batch, 8))
    return max(bb, 8)


def kld_mvn_diag_pallas(mu_q, sigma_q, mu_p, sigma_p):
    """mu_*, sigma_*: (..., D) f32 -> KL(p||q) with batch shape (...,)."""
    if mu_p.shape[0] != mu_q.shape[0]:
        raise ValueError(
            "KL-divergence between two Multivariate Normals with "
            "different event shapes cannot be computed"
        )

    batch_shape = mu_q.shape[:-1]
    D = mu_q.shape[-1]
    B = 1
    for s in batch_shape:
        B *= s

    def flat(x):
        return x.astype(jnp.float32).reshape(B, D)

    mq, sq, mp, sp = flat(mu_q), flat(sigma_q), flat(mu_p), flat(sigma_p)

    d_pad = max(128, _round_up(D, 128))          # lane-dense event axis
    bb = _choose_block_rows(B, d_pad)
    b_pad = _round_up(B, bb)

    def pad(x):
        return jnp.pad(x, ((0, b_pad - B), (0, d_pad - D)))

    mq, sq, mp, sp = pad(mq), pad(sq), pad(mp), pad(sp)

    in_spec = pl.BlockSpec((bb, d_pad), lambda i: (i, 0))
    out = pl.pallas_call(
        _kld_kernel,
        out_shape=jax.ShapeDtypeStruct((b_pad, 1), jnp.float32),
        grid_spec=pltpu.PrefetchScalarGridSpec(
            num_scalar_prefetch=0,
            grid=(b_pad // bb,),
            in_specs=[in_spec, in_spec, in_spec, in_spec],
            out_specs=pl.BlockSpec((bb, 1), lambda i: (i, 0)),
        ),
        compiler_params=pltpu.CompilerParams(
            dimension_semantics=("parallel",),   # independent blocks -> megacore OK
        ),
    )(mq, sq, mp, sp)

    return out[:B, 0].reshape(batch_shape)


class KLD_MVNx2:
    """Pallas-backed equivalent of the PyTorch _KLD_MVNx2 module."""

    def __call__(self, mu_q, sigma_q, mu_p, sigma_p):
        return kld_mvn_diag_pallas(mu_q, sigma_q, mu_p, sigma_p)


# ---------------------------- reference (JAX) ------------------------------ #
def kld_reference(mu_q, sigma_q, mu_p, sigma_p):
    D = mu_q.shape[-1]
    half_term1 = 0.5 * jnp.sum(sigma_q - sigma_p, axis=-1)
    term2 = jnp.sum(jnp.exp(sigma_p - sigma_q), axis=-1)
    term3 = jnp.sum((mu_q - mu_p) ** 2 * jnp.exp(-sigma_q), axis=-1)
    return half_term1 + 0.5 * (term2 + term3 - D)


if __name__ == "__main__":
    key = jax.random.PRNGKey(0)
    k1, k2, k3, k4 = jax.random.split(key, 4)

    B, D = 6, 32                                  # small, exercises B and D padding
    mu_q = jax.random.normal(k1, (B, D), dtype=jnp.float32)
    sigma_q = 0.5 * jax.random.normal(k2, (B, D), dtype=jnp.float32)
    mu_p = jax.random.normal(k3, (B, D), dtype=jnp.float32)
    sigma_p = 0.5 * jax.random.normal(k4, (B, D), dtype=jnp.float32)

    kl = KLD_MVNx2()(mu_q, sigma_q, mu_p, sigma_p)
    kl = jax.block_until_ready(kl)

    ref = jax.block_until_ready(kld_reference(mu_q, sigma_q, mu_p, sigma_p))
    assert kl.shape == (B,), kl.shape
    assert jnp.allclose(kl, ref, rtol=1e-5, atol=1e-5), (kl, ref)

    print("KERNEL_OK")
</pallas_src>

<mosaic_0001>
module attributes {stable_mosaic.version = 11 : i64} {
  func.func @_kld_kernel(%arg0: i32, %arg1: memref<8x128xf32, #tpu.memory_space<vmem>>, %arg2: memref<8x128xf32, #tpu.memory_space<vmem>>, %arg3: memref<8x128xf32, #tpu.memory_space<vmem>>, %arg4: memref<8x128xf32, #tpu.memory_space<vmem>>, %arg5: memref<8x1xf32, #tpu.memory_space<vmem>>) attributes {dimension_semantics = [#tpu.dimension_semantics<parallel>], iteration_bounds = array<i64: 1>, scalar_prefetch = 0 : i64, scratch_operands = 0 : i64, tpu.core_type = #tpu.core_type<tc>, window_params = [{transform_indices = @transform_0, window_bounds = array<i64: 8, 128>}, {transform_indices = @transform_1, window_bounds = array<i64: 8, 128>}, {transform_indices = @transform_2, window_bounds = array<i64: 8, 128>}, {transform_indices = @transform_3, window_bounds = array<i64: 8, 128>}, {transform_indices = @transform_4, window_bounds = array<i64: 8, 1>}]} {
    %c0 = arith.constant 0 : index
    %c0_0 = arith.constant 0 : index
    %0 = vector.load %arg1[%c0, %c0_0] : memref<8x128xf32, #tpu.memory_space<vmem>>, vector<8x128xf32>
    %c0_1 = arith.constant 0 : index
    %c0_2 = arith.constant 0 : index
    %1 = vector.load %arg2[%c0_1, %c0_2] : memref<8x128xf32, #tpu.memory_space<vmem>>, vector<8x128xf32>
    %c0_3 = arith.constant 0 : index
    %c0_4 = arith.constant 0 : index
    %2 = vector.load %arg3[%c0_3, %c0_4] : memref<8x128xf32, #tpu.memory_space<vmem>>, vector<8x128xf32>
    %c0_5 = arith.constant 0 : index
    %c0_6 = arith.constant 0 : index
    %3 = vector.load %arg4[%c0_5, %c0_6] : memref<8x128xf32, #tpu.memory_space<vmem>>, vector<8x128xf32>
    %4 = arith.subf %0, %2 : vector<8x128xf32>
    %cst = arith.constant 0.000000e+00 : f32
    %5 = vector.broadcast %cst : f32 to vector<8x128xf32>
    %6 = arith.subf %5, %1 : vector<8x128xf32>
    %7 = math.exp %6 : vector<8x128xf32>
    %8 = arith.subf %3, %1 : vector<8x128xf32>
    %9 = math.exp %8 : vector<8x128xf32>
    %10 = arith.subf %1, %3 : vector<8x128xf32>
    %cst_7 = arith.constant 1.000000e+00 : f32
    %11 = vector.broadcast %cst_7 : f32 to vector<8x128xf32>
    %12 = arith.subf %10, %11 : vector<8x128xf32>
    %13 = arith.addf %12, %9 : vector<8x128xf32>
    %14 = arith.mulf %4, %4 : vector<8x128xf32>
    %15 = arith.mulf %14, %7 : vector<8x128xf32>
    %16 = arith.addf %13, %15 : vector<8x128xf32>
    %cst_8 = arith.constant dense<0.000000e+00> : vector<8xf32>
    %17 = vector.multi_reduction <add>, %16, %cst_8 [1] : vector<8x128xf32> to vector<8xf32>
    %18 = vector.shape_cast %17 : vector<8xf32> to vector<8x1xf32>
    %cst_9 = arith.constant 5.000000e-01 : f32
    %19 = vector.broadcast %cst_9 : f32 to vector<8x1xf32>
    %20 = arith.mulf %19, %18 : vector<8x1xf32>
    %c0_10 = arith.constant 0 : index
    %c0_11 = arith.constant 0 : index
    %21 = vector.load %arg5[%c0_10, %c0_11] : memref<8x1xf32, #tpu.memory_space<vmem>>, vector<8x1xf32>
    tpu.vector_store %arg5[%c0_10, %c0_11], %20 {strides = array<i32>} : memref<8x1xf32, #tpu.memory_space<vmem>>, vector<8x1xf32>,
    return
  }
  func.func @transform_0(%arg0: i32) -> (i32, i32) {
    %c0_i32 = arith.constant 0 : i32
    %c0_i32_0 = arith.constant 0 : i32
    return %arg0, %c0_i32 : i32, i32
  }
  func.func @transform_1(%arg0: i32) -> (i32, i32) {
    %c0_i32 = arith.constant 0 : i32
    %c0_i32_0 = arith.constant 0 : i32
    return %arg0, %c0_i32 : i32, i32
  }
  func.func @transform_2(%arg0: i32) -> (i32, i32) {
    %c0_i32 = arith.constant 0 : i32
    %c0_i32_0 = arith.constant 0 : i32
    return %arg0, %c0_i32 : i32, i32
  }
  func.func @transform_3(%arg0: i32) -> (i32, i32) {
    %c0_i32 = arith.constant 0 : i32
    %c0_i32_0 = arith.constant 0 : i32
    return %arg0, %c0_i32 : i32, i32
  }
  func.func @transform_4(%arg0: i32) -> (i32, i32) {
    %c0_i32 = arith.constant 0 : i32
    %c0_i32_0 = arith.constant 0 : i32
    return %arg0, %c0_i32 : i32, i32
  }
}

</mosaic_0001>

<llo_original>
// kernel: tpu_custom_call.1
$region0: #{tpu_custom_call.1}
  #allocation0 [shape = 'u32[]', space=smem, size = 0x4, offset = 0x4, fixed_abs, tag = 'smem constant byte address 0x4 - core index']
  #allocation1 [shape = 'u32[144,128]{1,0:T(1,128)}', space=vmem, size = 0x12000, scoped, tag = 'internal scratch']
  %s0 = inlined_call_operand.hbm [shape: f32[8,128], index: 0, kind: input, shape index: {}]
  %s1 = inlined_call_operand.hbm [shape: f32[8,128], index: 1, kind: input, shape index: {}]
  %s2 = inlined_call_operand.hbm [shape: f32[8,128], index: 2, kind: input, shape index: {}]
  %s3 = inlined_call_operand.vmem [shape: f32[8,128], index: 3, kind: input, shape index: {}]
  %s4 = inlined_call_operand.vmem [shape: f32[8,1], index: 4, kind: output, shape index: {}]
  %s5 = sld [smem:[#allocation0]]
  $region38: #{tpu_custom_call.1} parent=0
    _
  %s7 = ssub.s32 1, %s5
  %s8 = scalar_select 0, %s7, %s5
  $region1: #{tpu_custom_call.1} parent=0
    #allocation2 [shape = 'u8[4096]{0}', space=vmem, size = 0x1000, scoped, tag = 'input window, operand 0, single buffered']
    #allocation3 [shape = 's32[1]{0}', space=sflag, size = 0x4, scoped, tag = 'scoped memory for tpu_custom_call.1']
    #allocation4 [shape = 'u8[4096]{0}', space=vmem, size = 0x1000, scoped, tag = 'input window, operand 1, single buffered']
    #allocation5 [shape = 's32[1]{0}', space=sflag, size = 0x4, scoped, tag = 'scoped memory for tpu_custom_call.1']
    #allocation6 [shape = 'u8[4096]{0}', space=vmem, size = 0x1000, scoped, tag = 'input window, operand 2, single buffered']
    %9 = vsyncpa [#allocation3], 0
    %10 = vsyncpa [#allocation5], 0
    // Predicated region
    $region2: #{tpu_custom_call.1} parent=1 // pred_check
      _
    $region3: #{tpu_custom_call.1} parent=1 // pred_check_branch
      %12 = sbr.rel (0) target = $region5
    $region4: #{tpu_custom_call.1} parent=1 // pred_region
      %s14 = ssub.s32 128, 128
      %15 = vsyncadd [#allocation3], %s14
      %s17 = sshll.u32 [#allocation2], 4
      %s18 = int_to_ptr.vmem [resolvable:$true] %s17
      %20 = dma.hbm_to_vmem [thread:$0]  %s0, 128, %s18, [#allocation3]
    $region5: #{tpu_custom_call.1} parent=1 // pred_fallthru
      _
    // Predicated region
    $region6: #{tpu_custom_call.1} parent=1 // pred_check
      _
    $region7: #{tpu_custom_call.1} parent=1 // pred_check_branch
      %22 = sbr.rel (0) target = $region9
    $region8: #{tpu_custom_call.1} parent=1 // pred_region
      %s24 = ssub.s32 128, 128
      %25 = vsyncadd [#allocation5], %s24
      %s27 = sshll.u32 [#allocation4], 4
      %s28 = int_to_ptr.vmem [resolvable:$true] %s27
      %30 = dma.hbm_to_vmem [thread:$0]  %s1, 128, %s28, [#allocation5]
    $region9: #{tpu_custom_call.1} parent=1 // pred_fallthru
      _
    // Predicated region
    $region10: #{tpu_custom_call.1} parent=1 // pred_check
      _
    $region11: #{tpu_custom_call.1} parent=1 // pred_check_branch
      %32 = sbr.rel (0) target = $region13
    $region12: #{tpu_custom_call.1} parent=1 // pred_region
      %s34 = ssub.s32 128, 128
      %35 = vsyncadd [#allocation5], %s34
      %s37 = sshll.u32 [#allocation6], 4
      %s38 = int_to_ptr.vmem [resolvable:$true] %s37
      %40 = dma.hbm_to_vmem [thread:$0]  %s2, 128, %s38, [#allocation5]
    $region13: #{tpu_custom_call.1} parent=1 // pred_fallthru
      _
    // Predicated region
    $region14: #{tpu_custom_call.1} parent=1 // pred_check
      _
    $region15: #{tpu_custom_call.1} parent=1 // pred_check_branch
      %42 = sbr.rel (0) target = $region17
    $region16: #{tpu_custom_call.1} parent=1 // pred_region
      _
    $region17: #{tpu_custom_call.1} parent=1 // pred_fallthru
      _
    // Predicated region
    $region18: #{tpu_custom_call.1} parent=1 // pred_check
      _
    $region19: #{tpu_custom_call.1} parent=1 // pred_check_branch
      %44 = sbr.rel (0) target = $region21
    $region20: #{tpu_custom_call.1} parent=1 // pred_region
      %45 = dma.done [#allocation3], 128
    $region21: #{tpu_custom_call.1} parent=1 // pred_fallthru
      _
    // Predicated region
    $region22: #{tpu_custom_call.1} parent=1 // pred_check
      _
    $region23: #{tpu_custom_call.1} parent=1 // pred_check_branch
      %47 = sbr.rel (0) target = $region25
    $region24: #{tpu_custom_call.1} parent=1 // pred_region
      %48 = dma.done [#allocation5], 128
    $region25: #{tpu_custom_call.1} parent=1 // pred_fallthru
      _
    // Predicated region
    $region26: #{tpu_custom_call.1} parent=1 // pred_check
      _
    $region27: #{tpu_custom_call.1} parent=1 // pred_check_branch
      %50 = sbr.rel (0) target = $region29
    $region28: #{tpu_custom_call.1} parent=1 // pred_region
      %51 = dma.done [#allocation5], 128
    $region29: #{tpu_custom_call.1} parent=1 // pred_fallthru
      _
    %v52 = vld [vmem:[#allocation2] sm:$0xff]
    %v53 = vld [vmem:[#allocation4] sm:$0xff]
    %v54 = vld [vmem:[#allocation6] sm:$0xff]
    %v55 = vld [vmem:[%s3] sm:$0xff]
    %v56 = vsub.f32 %v52, %v54
    %v57 = vsub.f32 0.0, %v53
    %v58 = vmul.f32 %v57, 1.442695
    %v59 = vpow.pop %v58
    %v60 = vsub.f32 %v55, %v53
    %v61 = vmul.f32 %v60, 1.442695
    %v62 = vpow.pop %v61
    %v63 = vsub.f32 %v53, %v55
    %v64 = vsub.f32 %v63, 1.0
    %v65 = vadd.f32 %v64, %v62
    %v66 = vmul.f32 %v56, %v56
    %v67 = vmul.f32 %v66, %v59
    %v68 = vadd.f32 %v65, %v67
    %69 = vadd.xlane.f32.xlu0 %v68
    %v70 = vpop.xlane.xlu0 %69
    %v71 = vmul.f32 %v70, 0.5
    %vm72 = vcmask 7168
    %73 = vst.msk [vmem:[%s4] sm:$0xff] %vm72, %v71
    // Predicated region
    $region30: #{tpu_custom_call.1} parent=1 // pred_check
      _
    $region31: #{tpu_custom_call.1} parent=1 // pred_check_branch
      %75 = sbr.rel (0) target = $region33
    $region32: #{tpu_custom_call.1} parent=1 // pred_region
      _
    $region33: #{tpu_custom_call.1} parent=1 // pred_fallthru
      _
    // Predicated region
    $region34: #{tpu_custom_call.1} parent=1 // pred_check
      _
    $region35: #{tpu_custom_call.1} parent=1 // pred_check_branch
      %77 = sbr.rel (0) target = $region37
    $region36: #{tpu_custom_call.1} parent=1 // pred_region
      _
    $region37: #{tpu_custom_call.1} parent=1 // pred_fallthru
      _
    %78 = vsyncpa [#allocation3], 1
    %79 = vsyncpa [#allocation5], 1

</llo_original>
